<compile_context>
chip_gen: v7x
topology: tpu7x:2x2x1
jax: 0.10.0
libtpu: 0.0.40
codegen_flags: <defaults>
</compile_context>

<pallas_src>
import jax
import jax.numpy as jnp
from jax.experimental import pallas as pl
from jax.experimental.pallas import tpu as pltpu


def _round_up(x, m):
    return ((x + m - 1) // m) * m


def _sublane_granule(dtype):
    # packed sublane granule: 8 rows for 32-bit, 16 for bf16, 32 for int8/fp8
    return 256 // (jnp.dtype(dtype).itemsize * 8)


# --------------- kernel 1: projection  HW = feat @ W.T ----------------------
def _project_kernel(feat_ref, wT_ref, hw_ref):
    hw_ref[...] = jnp.dot(
        feat_ref[...], wT_ref[...], preferred_element_type=jnp.float32
    ).astype(hw_ref.dtype)


# --------------- kernel 2: tiled aggregation  out = A @ HW + b --------------
def _make_aggregate_kernel(tk_eff, hw_resident):
    def kernel(adj_ref, hw_ref, b_ref, out_ref, acc_ref):
        k = pl.program_id(1)

        @pl.when(k == 0)
        def _():
            acc_ref[...] = jnp.zeros_like(acc_ref)

        if hw_resident:
            # HW lives whole in VMEM; slice the K-tile in-kernel (aligned).
            start = pl.multiple_of(k * tk_eff, tk_eff)
            hw_tile = hw_ref[pl.ds(start, tk_eff), :]
        else:
            hw_tile = hw_ref[...]

        acc_ref[...] += jnp.dot(
            adj_ref[...], hw_tile, preferred_element_type=jnp.float32
        )

        @pl.when(k == pl.num_programs(1) - 1)
        def _():
            out_ref[...] = (acc_ref[...] + b_ref[...]).astype(out_ref.dtype)

    return kernel


def gcn_layer(adj, feat, weight, bias, *, tm=512, tk=1024,
              compute_dtype=jnp.bfloat16,
              hw_resident_budget_bytes=16 * 2**20):
    """GCNLayer forward.

    adj    : (N, N)        adj[dst, src] = edge weight (0 where no edge)
    feat   : (N, F_in)     node features
    weight : (F_out, F_in) nn.Linear weight
    bias   : (F_out,)      nn.Linear bias
    returns: (N, F_out)    float32
    """
    n, f_in = feat.shape
    f_out = weight.shape[0]
    dt = jnp.dtype(compute_dtype)
    itemsize = dt.itemsize
    sub = _sublane_granule(dt)

    # ---- padded, lane-dense shapes (per-axis padding, no lcm blow-up) ------
    f_in_p = _round_up(f_in, 128)
    f_out_p = _round_up(f_out, 128)

    tm = _round_up(tm, sub)
    tk = _round_up(tk, 128)
    tm_eff = min(tm, _round_up(n, sub))      # row (dst) tile of A / output
    tk_eff = min(tk, _round_up(n, 128))      # reduction (src) tile
    n_rows_p = _round_up(n, tm_eff)          # dst axis of A, rows of output
    n_cols_p = _round_up(n, tk_eff)          # src axis of A, rows of HW

    # single-pass pad + dtype cast (cast fused into the padding write)
    adj_p = jnp.zeros((n_rows_p, n_cols_p), dt).at[:n, :n].set(adj.astype(dt))
    feat_p = jnp.zeros((n_cols_p, f_in_p), dt).at[:n, :f_in].set(
        feat.astype(dt))
    wT_p = jnp.zeros((f_in_p, f_out_p), dt).at[:f_in, :f_out].set(
        weight.T.astype(dt))
    b_p = jnp.zeros((1, f_out_p), jnp.float32).at[0, :f_out].set(
        bias.astype(jnp.float32))

    # ---- kernel 1: HW = feat @ W.T (small matmul FIRST, so the N^2
    #      aggregation streams F_out-wide rows, not F_in-wide) ---------------
    proj_tm = tk_eff  # divides n_cols_p by construction
    proj_vmem = (2 * proj_tm * f_in_p * itemsize
                 + 2 * f_in_p * f_out_p * itemsize
                 + 2 * proj_tm * f_out_p * itemsize)
    hw = pl.pallas_call(
        _project_kernel,
        out_shape=jax.ShapeDtypeStruct((n_cols_p, f_out_p), dt),
        grid_spec=pltpu.PrefetchScalarGridSpec(
            num_scalar_prefetch=0,
            grid=(n_cols_p // proj_tm,),
            in_specs=[
                pl.BlockSpec((proj_tm, f_in_p), lambda i: (i, 0)),
                pl.BlockSpec((f_in_p, f_out_p), lambda i: (0, 0)),  # resident
            ],
            out_specs=pl.BlockSpec((proj_tm, f_out_p), lambda i: (i, 0)),
        ),
        compiler_params=pltpu.CompilerParams(
            dimension_semantics=("parallel",),
            vmem_limit_bytes=int(min(64 * 2**20,
                                     max(16 * 2**20, 2 * proj_vmem)))),
        cost_estimate=pl.CostEstimate(
            flops=2 * n_cols_p * f_in_p * f_out_p,
            transcendentals=0,
            bytes_accessed=itemsize * (n_cols_p * f_in_p + f_in_p * f_out_p
                                       + n_cols_p * f_out_p)),
    )(feat_p, wT_p)

    # ---- kernel 2: tiled  out = A @ HW + b ----------------------------------
    hw_bytes = n_cols_p * f_out_p * itemsize
    hw_resident = hw_bytes <= hw_resident_budget_bytes

    if hw_resident:
        hw_spec = pl.BlockSpec((n_cols_p, f_out_p), lambda i, k: (0, 0))
        hw_vmem = hw_bytes
    else:
        hw_spec = pl.BlockSpec((tk_eff, f_out_p), lambda i, k: (k, 0))
        hw_vmem = 2 * tk_eff * f_out_p * itemsize

    agg_vmem = (2 * tm_eff * tk_eff * itemsize        # A double buffer
                + hw_vmem                              # HW (resident/streamed)
                + 2 * f_out_p * 4                      # bias
                + 2 * tm_eff * f_out_p * 4             # out double buffer
                + tm_eff * f_out_p * 4)                # f32 accumulator

    grid = (n_rows_p // tm_eff, n_cols_p // tk_eff)
    out_p = pl.pallas_call(
        _make_aggregate_kernel(tk_eff, hw_resident),
        out_shape=jax.ShapeDtypeStruct((n_rows_p, f_out_p), jnp.float32),
        grid_spec=pltpu.PrefetchScalarGridSpec(
            num_scalar_prefetch=0,
            grid=grid,
            in_specs=[
                pl.BlockSpec((tm_eff, tk_eff), lambda i, k: (i, k)),  # A tile
                hw_spec,                                              # HW
                pl.BlockSpec((1, f_out_p), lambda i, k: (0, 0)),      # bias
            ],
            out_specs=pl.BlockSpec((tm_eff, f_out_p), lambda i, k: (i, 0)),
            scratch_shapes=[pltpu.VMEM((tm_eff, f_out_p), jnp.float32)],
        ),
        compiler_params=pltpu.CompilerParams(
            dimension_semantics=("parallel", "arbitrary"),
            vmem_limit_bytes=int(min(64 * 2**20,
                                     max(16 * 2**20, 2 * agg_vmem)))),
        cost_estimate=pl.CostEstimate(
            flops=2 * n_rows_p * n_cols_p * f_out_p,
            transcendentals=0,
            bytes_accessed=(itemsize * (n_rows_p * n_cols_p
                                        + n_cols_p * f_out_p)
                            + 4 * n_rows_p * f_out_p)),
    )(adj_p, hw, b_p)

    return out_p[:n, :f_out]


if __name__ == "__main__":
    key = jax.random.PRNGKey(0)
    k_adj, k_mask, k_feat, k_w, k_b = jax.random.split(key, 5)

    N = 16        # number of graph nodes
    F_IN = 8      # in_feats
    F_OUT = 4     # out_feats

    # Deterministic synthetic weighted adjacency (sparse-ish dense matrix).
    raw = jax.random.uniform(k_adj, (N, N), dtype=jnp.float32)
    mask = (jax.random.uniform(k_mask, (N, N)) < 0.3).astype(jnp.float32)
    adj = raw * mask                                   # adj[dst, src]

    feat = jax.random.normal(k_feat, (N, F_IN), dtype=jnp.float32)

    # Deterministic nn.Linear(in_feats, out_feats) parameters.
    bound = 1.0 / (F_IN ** 0.5)
    weight = jax.random.uniform(k_w, (F_OUT, F_IN), minval=-bound, maxval=bound,
                                dtype=jnp.float32)
    bias = jax.random.uniform(k_b, (F_OUT,), minval=-bound, maxval=bound,
                              dtype=jnp.float32)

    # Pure-JAX reference (DGL u_mul_e + sum followed by Linear).
    ref = (adj @ feat) @ weight.T + bias

    # Exact-precision path (f32 adjacency / HW) -> tight tolerance.
    out_f32 = gcn_layer(adj, feat, weight, bias, compute_dtype=jnp.float32)
    jax.block_until_ready(out_f32)
    assert out_f32.shape == (N, F_OUT)
    assert jnp.allclose(out_f32, ref, atol=1e-4, rtol=1e-4)

    # Default bandwidth-optimized path (bf16 adjacency / HW, f32 accumulation)
    # -> relaxed tolerance for bf16 rounding of edge weights / features.
    out_bf16 = gcn_layer(adj, feat, weight, bias)
    jax.block_until_ready(out_bf16)
    assert out_bf16.shape == (N, F_OUT)
    assert jnp.allclose(out_bf16, ref, atol=5e-2, rtol=5e-2)

    print("KERNEL_OK")
</pallas_src>

<mosaic_0001>
module attributes {stable_mosaic.version = 11 : i64} {
  func.func @_project_kernel(%arg0: i32, %arg1: memref<128x128xf32, #tpu.memory_space<vmem>>, %arg2: memref<128x128xf32, #tpu.memory_space<vmem>>, %arg3: memref<128x128xf32, #tpu.memory_space<vmem>>) attributes {dimension_semantics = [#tpu.dimension_semantics<parallel>], iteration_bounds = array<i64: 1>, scalar_prefetch = 0 : i64, scratch_operands = 0 : i64, tpu.core_type = #tpu.core_type<tc>, window_params = [{transform_indices = @transform_0, window_bounds = array<i64: 128, 128>}, {pipeline_mode = #tpu.pipeline_mode<synchronous>, transform_indices = @transform_1, window_bounds = array<i64: 128, 128>}, {transform_indices = @transform_2, window_bounds = array<i64: 128, 128>}]} {
    %c0 = arith.constant 0 : index
    %c0_0 = arith.constant 0 : index
    %0 = vector.load %arg1[%c0, %c0_0] : memref<128x128xf32, #tpu.memory_space<vmem>>, vector<128x128xf32>
    %c0_1 = arith.constant 0 : index
    %c0_2 = arith.constant 0 : index
    %1 = vector.load %arg2[%c0_1, %c0_2] : memref<128x128xf32, #tpu.memory_space<vmem>>, vector<128x128xf32>
    %cst = arith.constant dense<0.000000e+00> : vector<128x128xf32>
    %2 = tpu.matmul %0, %1, %cst {dimension_numbers = #tpu.dot_dimension_numbers<[1], [0], [0], [1], [0, 0, 1, 1], [], []>} : vector<128x128xf32>, vector<128x128xf32>, vector<128x128xf32> -> vector<128x128xf32>
    %c0_3 = arith.constant 0 : index
    %c0_4 = arith.constant 0 : index
    %3 = vector.load %arg3[%c0_3, %c0_4] : memref<128x128xf32, #tpu.memory_space<vmem>>, vector<128x128xf32>
    tpu.vector_store %arg3[%c0_3, %c0_4], %2 {strides = array<i32>} : memref<128x128xf32, #tpu.memory_space<vmem>>, vector<128x128xf32>,
    return
  }
  func.func @transform_0(%arg0: i32) -> (i32, i32) {
    %c0_i32 = arith.constant 0 : i32
    %c0_i32_0 = arith.constant 0 : i32
    return %arg0, %c0_i32 : i32, i32
  }
  func.func @transform_1(%arg0: i32) -> (i32, i32) {
    %c0_i32 = arith.constant 0 : i32
    %c0_i32_0 = arith.constant 0 : i32
    %c0_i32_1 = arith.constant 0 : i32
    return %c0_i32, %c0_i32_0 : i32, i32
  }
  func.func @transform_2(%arg0: i32) -> (i32, i32) {
    %c0_i32 = arith.constant 0 : i32
    %c0_i32_0 = arith.constant 0 : i32
    return %arg0, %c0_i32 : i32, i32
  }
}

</mosaic_0001>

<llo_original>
// kernel: tpu_custom_call.1
$region0: #{tpu_custom_call.1}
  #allocation0 [shape = 'u32[]', space=smem, size = 0x4, offset = 0x4, fixed_abs, tag = 'smem constant byte address 0x4 - core index']
  #allocation1 [shape = 'u32[144,128]{1,0:T(1,128)}', space=vmem, size = 0x12000, scoped, tag = 'internal scratch']
  %s0 = inlined_call_operand.hbm [shape: f32[128,128], index: 0, kind: input, shape index: {}]
  %s1 = inlined_call_operand.hbm [shape: f32[128,128], index: 1, kind: input, shape index: {}]
  %s2 = inlined_call_operand.hbm [shape: f32[128,128], index: 2, kind: output, shape index: {}]
  %s3 = sld [smem:[#allocation0]]
  $region26: #{tpu_custom_call.1} parent=0
    _
  %s5 = ssub.s32 1, %s3
  %s6 = scalar_select 0, %s5, %s3
  $region1: #{tpu_custom_call.1} parent=0
    #allocation2 [shape = 'u8[65536]{0}', space=vmem, size = 0x10000, scoped, tag = 'input window, operand 0, single buffered']
    #allocation3 [shape = 's32[1]{0}', space=sflag, size = 0x4, scoped, tag = 'scoped memory for tpu_custom_call.1']
    #allocation4 [shape = 's32[1]{0}', space=sflag, size = 0x4, scoped, tag = 'scoped memory for tpu_custom_call.1']
    #allocation5 [shape = 'u8[65536]{0}', space=vmem, size = 0x10000, scoped, tag = 'input window, operand 1, single buffered']
    #allocation6 [shape = 's32[1]{0}', space=sflag, size = 0x4, scoped, tag = 'scoped memory for tpu_custom_call.1']
    #allocation7 [shape = 'u8[65536]{0}', space=vmem, size = 0x10000, scoped, tag = 'output window, operand 0, single buffered']
    %7 = vsyncpa [#allocation3], 0
    %8 = vsyncpa [#allocation6], 0
    %9 = vsyncpa [#allocation4], 0
    // Predicated region
    $region2: #{tpu_custom_call.1} parent=1 // pred_check
      _
    $region3: #{tpu_custom_call.1} parent=1 // pred_check_branch
      %11 = sbr.rel (0) target = $region5
    $region4: #{tpu_custom_call.1} parent=1 // pred_region
      %s13 = ssub.s32 2048, 2048
      %14 = vsyncadd [#allocation3], %s13
      %s15 = sshll.u32 [#allocation2], 4
      %s16 = int_to_ptr.vmem [resolvable:$true] %s15
      %21 = dma.hbm_to_vmem [thread:$0]  %s0, 2048, %s16, [#allocation3], 128, 128, 8
    $region5: #{tpu_custom_call.1} parent=1 // pred_fallthru
      _
    // Predicated region
    $region6: #{tpu_custom_call.1} parent=1 // pred_check
      _
    $region7: #{tpu_custom_call.1} parent=1 // pred_check_branch
      %23 = sbr.rel (0) target = $region9
    $region8: #{tpu_custom_call.1} parent=1 // pred_region
      %s25 = ssub.s32 2048, 2048
      %26 = vsyncadd [#allocation6], %s25
      %s27 = sshll.u32 [#allocation5], 4
      %s28 = int_to_ptr.vmem [resolvable:$true] %s27
      %33 = dma.hbm_to_vmem [thread:$0]  %s1, 2048, %s28, [#allocation6], 128, 128, 8
    $region9: #{tpu_custom_call.1} parent=1 // pred_fallthru
      _
    // Predicated region
    $region10: #{tpu_custom_call.1} parent=1 // pred_check
      _
    $region11: #{tpu_custom_call.1} parent=1 // pred_check_branch
      %35 = sbr.rel (0) target = $region13
    $region12: #{tpu_custom_call.1} parent=1 // pred_region
      %36 = dma.done [#allocation3], 2048
    $region13: #{tpu_custom_call.1} parent=1 // pred_fallthru
      _
    // Predicated region
    $region14: #{tpu_custom_call.1} parent=1 // pred_check
      _
    $region15: #{tpu_custom_call.1} parent=1 // pred_check_branch
      %38 = sbr.rel (0) target = $region17
    $region16: #{tpu_custom_call.1} parent=1 // pred_region
      %39 = dma.done [#allocation6], 2048
    $region17: #{tpu_custom_call.1} parent=1 // pred_fallthru
      _
    %v40 = vld [vmem:[#allocation2] sm:$0xff]
    %v41 = vld [vmem:[#allocation2 + $0x8] sm:$0xff]
    %v42 = vld [vmem:[#allocation2 + $0x10] sm:$0xff]
    %v43 = vld [vmem:[#allocation2 + $0x18] sm:$0xff]
    %v44 = vld [vmem:[#allocation2 + $0x20] sm:$0xff]
    %v45 = vld [vmem:[#allocation2 + $0x28] sm:$0xff]
    %v46 = vld [vmem:[#allocation2 + $0x30] sm:$0xff]
    %v47 = vld [vmem:[#allocation2 + $0x38] sm:$0xff]
    %v48 = vld [vmem:[#allocation2 + $0x40] sm:$0xff]
    %v49 = vld [vmem:[#allocation2 + $0x48] sm:$0xff]
    %v50 = vld [vmem:[#allocation2 + $0x50] sm:$0xff]
    %v51 = vld [vmem:[#allocation2 + $0x58] sm:$0xff]
    %v52 = vld [vmem:[#allocation2 + $0x60] sm:$0xff]
    %v53 = vld [vmem:[#allocation2 + $0x68] sm:$0xff]
    %v54 = vld [vmem:[#allocation2 + $0x70] sm:$0xff]
    %v55 = vld [vmem:[#allocation2 + $0x78] sm:$0xff]
    %v56 = vld [vmem:[#allocation5] sm:$0xff]
    %v57 = vld [vmem:[#allocation5 + $0x8] sm:$0xff]
    %v58 = vld [vmem:[#allocation5 + $0x10] sm:$0xff]
    %v59 = vld [vmem:[#allocation5 + $0x18] sm:$0xff]
    %v60 = vld [vmem:[#allocation5 + $0x20] sm:$0xff]
    %v61 = vld [vmem:[#allocation5 + $0x28] sm:$0xff]
    %v62 = vld [vmem:[#allocation5 + $0x30] sm:$0xff]
    %v63 = vld [vmem:[#allocation5 + $0x38] sm:$0xff]
    %v64 = vld [vmem:[#allocation5 + $0x40] sm:$0xff]
    %v65 = vld [vmem:[#allocation5 + $0x48] sm:$0xff]
    %v66 = vld [vmem:[#allocation5 + $0x50] sm:$0xff]
    %v67 = vld [vmem:[#allocation5 + $0x58] sm:$0xff]
    %v68 = vld [vmem:[#allocation5 + $0x60] sm:$0xff]
    %v69 = vld [vmem:[#allocation5 + $0x68] sm:$0xff]
    %v70 = vld [vmem:[#allocation5 + $0x70] sm:$0xff]
    %v71 = vld [vmem:[#allocation5 + $0x78] sm:$0xff]
    %72 = vmatprep.subr.mxu0 0.0
    %73 = vmatpush1.msra.mxu0 %v56
    %74 = vmatprep.subr.mxu0 0.0
    %75 = vmatpush1.msra.mxu0 %v57
    %76 = vmatprep.subr.mxu0 0.0
    %77 = vmatpush1.msra.mxu0 %v58
    %78 = vmatprep.subr.mxu0 0.0
    %79 = vmatpush1.msra.mxu0 %v59
    %80 = vmatprep.subr.mxu0 0.0
    %81 = vmatpush1.msra.mxu0 %v60
    %82 = vmatprep.subr.mxu0 0.0
    %83 = vmatpush1.msra.mxu0 %v61
    %84 = vmatprep.subr.mxu0 0.0
    %85 = vmatpush1.msra.mxu0 %v62
    %86 = vmatprep.subr.mxu0 0.0
    %87 = vmatpush1.msra.mxu0 %v63
    %88 = vmatprep.subr.mxu0 0.0
    %89 = vmatpush1.msra.mxu0 %v64
    %90 = vmatprep.subr.mxu0 0.0
    %91 = vmatpush1.msra.mxu0 %v65
    %92 = vmatprep.subr.mxu0 0.0
    %93 = vmatpush1.msra.mxu0 %v66
    %94 = vmatprep.subr.mxu0 0.0
    %95 = vmatpush1.msra.mxu0 %v67
    %96 = vmatprep.subr.mxu0 0.0
    %97 = vmatpush1.msra.mxu0 %v68
    %98 = vmatprep.subr.mxu0 0.0
    %99 = vmatpush1.msra.mxu0 %v69
    %100 = vmatprep.subr.mxu0 0.0
    %101 = vmatpush1.msra.mxu0 %v70
    %102 = vmatprep.subr.mxu0 0.0
    %103 = vmatpush1.msra.mxu0 %v71
    %104 = vmatprep.subr.mxu0 0.0
    %105 = vmatpush1.msra.mxu0 0.0
    %106 = vmatprep.subr.mxu0 0.0
    %107 = vmatpush1.msra.mxu0 0.0
    %108 = vmatprep.subr.mxu0 0.0
    %109 = vmatpush1.msra.mxu0 0.0
    %110 = vmatprep.subr.mxu0 0.0
    %111 = vmatpush1.msra.mxu0 0.0
    %112 = vmatprep.subr.mxu0 0.0
    %113 = vmatpush1.msra.mxu0 0.0
    %114 = vmatprep.subr.mxu0 0.0
    %115 = vmatpush1.msra.mxu0 0.0
    %116 = vmatprep.subr.mxu0 0.0
    %117 = vmatpush1.msra.mxu0 0.0
    %118 = vmatprep.subr.mxu0 0.0
    %119 = vmatpush1.msra.mxu0 0.0
    %120 = vmatprep.subr.mxu0 0.0
    %121 = vmatpush1.msra.mxu0 0.0
    %122 = vmatprep.subr.mxu0 0.0
    %123 = vmatpush1.msra.mxu0 0.0
    %124 = vmatprep.subr.mxu0 0.0
    %125 = vmatpush1.msra.mxu0 0.0
    %126 = vmatprep.subr.mxu0 0.0
    %127 = vmatpush1.msra.mxu0 0.0
    %128 = vmatprep.subr.mxu0 0.0
    %129 = vmatpush1.msra.mxu0 0.0
    %130 = vmatprep.subr.mxu0 0.0
    %131 = vmatpush1.msra.mxu0 0.0
    %132 = vmatprep.subr.mxu0 0.0
    %133 = vmatpush1.msra.mxu0 0.0
    %134 = vmatprep.subr.mxu0 0.0
    %135 = vmatpush1.msra.mxu0 0.0
    %136 = vmatprep.mubr.f32.mxu0 0.0
    %137 = vmatmul.mubr.f32.gmra.mrb[0].mxu0 %v40
    %v138 = vpop.f32.mrb[0].mxu0
    %v139 = vadd.f32 0.0, %v138
    %v140 = vpop.f32.mrb[0].mxu0
    %141 = vmatprep.mubr.f32.mxu0 0.0
    %142 = vmatmul.mubr.f32.gmra.mrb[0].mxu0 %v41
    %v143 = vpop.f32.mrb[0].mxu0
    %v144 = vadd.f32 0.0, %v143
    %v145 = vpop.f32.mrb[0].mxu0
    %146 = vmatprep.mubr.f32.mxu0 0.0
    %147 = vmatmul.mubr.f32.gmra.mrb[0].mxu0 %v42
    %v148 = vpop.f32.mrb[0].mxu0
    %v149 = vadd.f32 0.0, %v148
    %v150 = vpop.f32.mrb[0].mxu0
    %151 = vmatprep.mubr.f32.mxu0 0.0
    %152 = vmatmul.mubr.f32.gmra.mrb[0].mxu0 %v43
    %v153 = vpop.f32.mrb[0].mxu0
    %v154 = vadd.f32 0.0, %v153
    %v155 = vpop.f32.mrb[0].mxu0
    %156 = vmatprep.mubr.f32.mxu0 0.0
    %157 = vmatmul.mubr.f32.gmra.mrb[0].mxu0 %v44
    %v158 = vpop.f32.mrb[0].mxu0
    %v159 = vadd.f32 0.0, %v158
    %v160 = vpop.f32.mrb[0].mxu0
    %161 = vmatprep.mubr.f32.mxu0 0.0
    %162 = vmatmul.mubr.f32.gmra.mrb[0].mxu0 %v45
    %v163 = vpop.f32.mrb[0].mxu0
    %v164 = vadd.f32 0.0, %v163
    %v165 = vpop.f32.mrb[0].mxu0
    %166 = vmatprep.mubr.f32.mxu0 0.0
    %167 = vmatmul.mubr.f32.gmra.mrb[0].mxu0 %v46
    %v168 = vpop.f32.mrb[0].mxu0
    %v169 = vadd.f32 0.0, %v168
    %v170 = vpop.f32.mrb[0].mxu0
    %171 = vmatprep.mubr.f32.mxu0 0.0
    %172 = vmatmul.mubr.f32.gmra.mrb[0].mxu0 %v47
    %v173 = vpop.f32.mrb[0].mxu0
    %v174 = vadd.f32 0.0, %v173
    %v175 = vpop.f32.mrb[0].mxu0
    %176 = vmatprep.mubr.f32.mxu0 0.0
    %177 = vmatmul.mubr.f32.gmra.mrb[0].mxu0 %v48
    %v178 = vpop.f32.mrb[0].mxu0
    %v179 = vadd.f32 0.0, %v178
    %v180 = vpop.f32.mrb[0].mxu0
    %181 = vmatprep.mubr.f32.mxu0 0.0
    %182 = vmatmul.mubr.f32.gmra.mrb[0].mxu0 %v49
    %v183 = vpop.f32.mrb[0].mxu0
    %v184 = vadd.f32 0.0, %v183
    %v185 = vpop.f32.mrb[0].mxu0
    %186 = vmatprep.mubr.f32.mxu0 0.0
    %187 = vmatmul.mubr.f32.gmra.mrb[0].mxu0 %v50
    %v188 = vpop.f32.mrb[0].mxu0
    %v189 = vadd.f32 0.0, %v188
    %v190 = vpop.f32.mrb[0].mxu0
    %191 = vmatprep.mubr.f32.mxu0 0.0
    %192 = vmatmul.mubr.f32.gmra.mrb[0].mxu0 %v51
    %v193 = vpop.f32.mrb[0].mxu0
    %v194 = vadd.f32 0.0, %v193
    %v195 = vpop.f32.mrb[0].mxu0
    %196 = vmatprep.mubr.f32.mxu0 0.0
    %197 = vmatmul.mubr.f32.gmra.mrb[0].mxu0 %v52
    %v198 = vpop.f32.mrb[0].mxu0
    %v199 = vadd.f32 0.0, %v198
    %v200 = vpop.f32.mrb[0].mxu0
    %201 = vmatprep.mubr.f32.mxu0 0.0
    %202 = vmatmul.mubr.f32.gmra.mrb[0].mxu0 %v53
    %v203 = vpop.f32.mrb[0].mxu0
    %v204 = vadd.f32 0.0, %v203
    %v205 = vpop.f32.mrb[0].mxu0
    %206 = vmatprep.mubr.f32.mxu0 0.0
    %207 = vmatmul.mubr.f32.gmra.mrb[0].mxu0 %v54
    %v208 = vpop.f32.mrb[0].mxu0
    %v209 = vadd.f32 0.0, %v208
    %v210 = vpop.f32.mrb[0].mxu0
    %211 = vmatprep.mubr.f32.mxu0 0.0
    %212 = vmatmul.mubr.f32.gmra.mrb[0].mxu0 %v55
    %v213 = vpop.f32.mrb[0].mxu0
    %v214 = vadd.f32 0.0, %v213
    %v215 = vpop.f32.mrb[0].mxu0
    %216 = vdwg.mxu0
    %217 = vst [vmem:[#allocation7] sm:$0xff] %v139
    %218 = vst [vmem:[#allocation7 + $0x8] sm:$0xff] %v144
    %219 = vst [vmem:[#allocation7 + $0x10] sm:$0xff] %v149
    %220 = vst [vmem:[#allocation7 + $0x18] sm:$0xff] %v154
    %221 = vst [vmem:[#allocation7 + $0x20] sm:$0xff] %v159
    %222 = vst [vmem:[#allocation7 + $0x28] sm:$0xff] %v164
    %223 = vst [vmem:[#allocation7 + $0x30] sm:$0xff] %v169
    %224 = vst [vmem:[#allocation7 + $0x38] sm:$0xff] %v174
    %225 = vst [vmem:[#allocation7 + $0x40] sm:$0xff] %v179
    %226 = vst [vmem:[#allocation7 + $0x48] sm:$0xff] %v184
    %227 = vst [vmem:[#allocation7 + $0x50] sm:$0xff] %v189
    %228 = vst [vmem:[#allocation7 + $0x58] sm:$0xff] %v194
    %229 = vst [vmem:[#allocation7 + $0x60] sm:$0xff] %v199
    %230 = vst [vmem:[#allocation7 + $0x68] sm:$0xff] %v204
    %231 = vst [vmem:[#allocation7 + $0x70] sm:$0xff] %v209
    %232 = vst [vmem:[#allocation7 + $0x78] sm:$0xff] %v214
    // Predicated region
    $region18: #{tpu_custom_call.1} parent=1 // pred_check
      _
    $region19: #{tpu_custom_call.1} parent=1 // pred_check_branch
      %234 = sbr.rel (0) target = $region21
    $region20: #{tpu_custom_call.1} parent=1 // pred_region
      %s236 = ssub.s32 2048, 2048
      %237 = vsyncadd [#allocation4], %s236
      %s238 = sshll.u32 [#allocation7], 4
      %s239 = int_to_ptr.vmem [resolvable:$true] %s238
      %244 = dma.vmem_to_hbm [thread:$0]  %s239, 2048, %s2, [#allocation4], 128, 128, 8
    $region21: #{tpu_custom_call.1} parent=1 // pred_fallthru
      _
    // Predicated region
    $region22: #{tpu_custom_call.1} parent=1 // pred_check
      _
    $region23: #{tpu_custom_call.1} parent=1 // pred_check_branch
      %246 = sbr.rel (0) target = $region25
    $region24: #{tpu_custom_call.1} parent=1 // pred_region
      %247 = dma.done [#allocation4], 2048
    $region25: #{tpu_custom_call.1} parent=1 // pred_fallthru
      _
    %248 = vsyncpa [#allocation3], 1
    %249 = vsyncpa [#allocation6], 1
    %250 = vsyncpa [#allocation4], 1

</llo_original>
